<compile_context>
chip_gen: v6e
topology: v6e:2x2x1
jax: 0.10.0
libtpu: 0.0.40
codegen_flags: <defaults>
</compile_context>

<pallas_src>
import jax
import jax.numpy as jnp
from jax.experimental import pallas as pl
from jax.experimental.pallas import tpu as pltpu

# ---------------- config (efficientdet-like defaults, small synthetic sizes) ---
NUM_LEVELS = 3
NUM_CLASSES = 8
NUM_ANCHORS = 3                      # anchors per spatial location
IN_CH = 4
FEAT_CH = 32
STRIDES = (4, 8, 16)
ALPHA = 0.25                         # focal-loss alpha
GAMMA = 1.5                          # focal-loss gamma -> modulating = (1-p_t)**1.5
DELTA = 0.1                          # huber delta
BOX_LOSS_WEIGHT = 50.0
LABEL_SMOOTHING = 0.0

LANES = 128
CLS_LANES = NUM_ANCHORS * NUM_CLASSES      # 24 (anchor-major, class minor)
BOX_LANES = NUM_ANCHORS * 4                # 12
HEAD_LANES = CLS_LANES + BOX_LANES         # 36 lanes per spatial position
PACK = LANES // HEAD_LANES                 # 3 spatial positions per lane row
K_RAW = PACK * IN_CH + 1                   # 12 feature cols + 1 ones (bias) col
K_PACK = 16                                # contraction dim, padded to mult of 8
MAX_TILE_G = 512                           # grouped rows per grid step (cap)
MATMUL_DTYPE = jnp.bfloat16                # MXU operand dtype (f32 accumulation)

assert PACK >= 1 and PACK * HEAD_LANES <= LANES and K_RAW <= K_PACK


def _round_up(x, m):
    return (x + m - 1) // m * m


# ================= fused Pallas kernel: folded heads + focal/huber loss =========
def _fused_bench_kernel(lvl_ref, feat_ref, w_ref, tgt_ref, out_ref):
    """One grid step = one tile of `tile_g` grouped rows (PACK positions/row).

    lvl_ref  : (n_tiles,) int32 SMEM  per-tile level id (used by index_maps only)
    feat_ref : (tile_g, 16)  bf16     PACK positions' features + ones column
    w_ref    : (1, 16, 128)  bf16     block-diag folded stem@[cls|box] + bias row
    tgt_ref  : (tile_g, 128) f32      merged targets: class target replicated on
                                      the 24 class lanes, box targets on the 12
                                      box lanes, per packed position
    out_ref  : (1, 8, 128)   f32      lane-dense partial-loss block for this tile
    """
    del lvl_ref  # consumed by the index_maps only

    # ---- folded (stem . head) 1x1 conv + bias: one lane-dense MXU matmul ------
    logits = jnp.dot(feat_ref[...], w_ref[0],
                     preferred_element_type=jnp.float32)       # [tile_g, 128] f32
    tgt = tgt_ref[...]                                         # [tile_g, 128] f32

    # ---- static per-lane structure (no div/mod by 36: compares + muls only) ---
    lane = jax.lax.broadcasted_iota(jnp.int32, (1, LANES), 1)
    pos = jnp.zeros_like(lane)
    for p in range(1, PACK):
        pos = pos + jnp.where(lane >= p * HEAD_LANES, 1, 0)
    q = lane - pos * HEAD_LANES                   # lane index within a position
    is_cls = q < CLS_LANES                        # class lanes (pad lanes: q>=36)
    is_box = jnp.logical_and(q >= CLS_LANES, q < HEAD_LANES)
    if (NUM_CLASSES & (NUM_CLASSES - 1)) == 0:
        class_id = jnp.bitwise_and(q, NUM_CLASSES - 1)
    else:
        class_id = q % NUM_CLASSES
    class_id = class_id.astype(jnp.float32)

    # ---- sigmoid focal loss on the class lanes (masked, lane-dense) -----------
    cls_valid = jnp.where(jnp.logical_and(is_cls, tgt != -2.0), 1.0, 0.0)
    oh = jnp.where(jnp.logical_and(class_id == tgt, tgt >= 0.0), 1.0, 0.0)
    p_sig = jax.nn.sigmoid(logits)
    onem = 1.0 - oh
    p_t = oh * p_sig + onem * (1.0 - p_sig)
    alpha_factor = oh * ALPHA + onem * (1.0 - ALPHA)
    one_m_pt = 1.0 - p_t
    modulating = one_m_pt * jnp.sqrt(one_m_pt)    # (1 - p_t) ** 1.5
    if LABEL_SMOOTHING > 0.0:
        tgt_s = oh * (1.0 - LABEL_SMOOTHING) + 0.5 * LABEL_SMOOTHING
    else:
        tgt_s = oh
    # stable BCE-with-logits; log(1+exp(-|x|)) == -log(sigmoid(|x|)) reuses the
    # sigmoid (saves one exp per element on the single EUP slot).
    ce = (jnp.maximum(logits, 0.0) - logits * tgt_s
          - jnp.log(jnp.where(logits >= 0.0, p_sig, 1.0 - p_sig)))
    fl = alpha_factor * modulating * ce * cls_valid

    # ---- masked Huber box loss on the box lanes --------------------------------
    # NOTE: tgt == 0.0 drops exactly-zero true box targets — matches the
    # reference semantics (and zeroes out pad rows / non-box lanes).
    box_mask = jnp.where(jnp.logical_and(is_box, tgt != 0.0), 1.0, 0.0)
    abs_err = jnp.abs(logits - tgt)
    quad = jnp.minimum(abs_err, DELTA)
    lin = abs_err - quad
    hl = (0.5 * quad * quad + DELTA * lin) * box_mask

    # ---- sublane-only chunked reduction to a lane-dense [8, 128] partial -------
    loss = fl + hl                                            # cls/box lanes disjoint
    tile_g = loss.shape[0]                                    # static, multiple of 8
    acc = loss[0:8]
    for i in range(1, tile_g // 8):
        acc = acc + loss[i * 8:(i + 1) * 8]
    out_ref[0] = acc


# ============================ wrapper-side packing ==============================
def level_features(x_nchw):
    """Backbone stand-in: strided average-pool pyramid, flattened NHWC rows."""
    B, Cin, H, W = x_nchw.shape
    x = jnp.transpose(x_nchw, (0, 2, 3, 1))          # NCHW -> NHWC
    feats = []
    for l in range(NUM_LEVELS):
        s = STRIDES[l]
        h, w = H // s, W // s
        f = x.reshape(B, h, s, w, s, Cin).mean(axis=(2, 4))
        feats.append(f.reshape(B * h * w, Cin))
    return feats


def _pack_params(params):
    """Fold stem into head weights, block-diag over PACK positions, fold bias."""
    ws = []
    for l in range(NUM_LEVELS):
        head_w = jnp.concatenate(
            [params[f"cls_w_{l}"], params[f"box_w_{l}"]], axis=1)   # [FEAT, 36]
        head_b = jnp.concatenate(
            [params[f"cls_b_{l}"], params[f"box_b_{l}"]], axis=1)   # [1, 36]
        w = params["stem_w"] @ head_w                               # [IN_CH, 36]
        b = params["stem_b"] @ head_w + head_b                      # [1, 36]
        wk = jnp.zeros((K_PACK, LANES), jnp.float32)
        for p in range(PACK):
            wk = wk.at[p * IN_CH:(p + 1) * IN_CH,
                       p * HEAD_LANES:(p + 1) * HEAD_LANES].set(w)
            wk = wk.at[PACK * IN_CH,
                       p * HEAD_LANES:(p + 1) * HEAD_LANES].set(b[0])  # bias row
        ws.append(wk)
    return jnp.stack(ws).astype(MATMUL_DTYPE)                       # [L, 16, 128]


def _pack_inputs(feats, target, g_pads, tile_g):
    """Ragged level-major packing of features + one merged f32 target slab."""
    feat_rows, tgt_rows, level_ids = [], [], []
    # pad rows: class lanes -> -2 (ignore), box lanes -> 0 (masked by box_t != 0)
    pad_row = jnp.concatenate(
        [jnp.full((1, CLS_LANES), -2.0, jnp.float32),
         jnp.zeros((1, BOX_LANES), jnp.float32)], axis=1)            # [1, 36]
    for l in range(NUM_LEVELS):
        f = feats[l]                                                 # [M_l, IN_CH]
        m = f.shape[0]
        g_pad = g_pads[l]
        m_pad = g_pad * PACK

        cls_t = target[f"label_cls_{l}"].reshape(m, NUM_ANCHORS).astype(jnp.float32)
        box_t = target[f"label_bbox_{l}"].reshape(m, NUM_ANCHORS * 4)
        box_t = box_t.astype(jnp.float32)
        # per-position 36-lane slab: replicated class target | box target
        slab = jnp.concatenate(
            [jnp.repeat(cls_t, NUM_CLASSES, axis=1), box_t], axis=1)  # [m, 36]
        slab = jnp.concatenate(
            [slab, jnp.broadcast_to(pad_row, (m_pad - m, HEAD_LANES))], axis=0)
        slab = slab.reshape(g_pad, PACK * HEAD_LANES)                 # [g, 108]
        slab = jnp.pad(slab, ((0, 0), (0, LANES - PACK * HEAD_LANES)))
        tgt_rows.append(slab)

        fp = jnp.pad(f, ((0, m_pad - m), (0, 0))).reshape(g_pad, PACK * IN_CH)
        fp = jnp.concatenate(
            [fp, jnp.ones((g_pad, 1), fp.dtype),                      # ones (bias) col
             jnp.zeros((g_pad, K_PACK - PACK * IN_CH - 1), fp.dtype)], axis=1)
        feat_rows.append(fp)

        level_ids += [l] * (g_pad // tile_g)

    feat_p = jnp.concatenate(feat_rows, axis=0).astype(MATMUL_DTYPE)  # [G, 16]
    tgt_p = jnp.concatenate(tgt_rows, axis=0)                         # [G, 128] f32
    return feat_p, tgt_p, jnp.asarray(level_ids, jnp.int32)


# ============================== DetBenchTrain.forward ===========================
def det_bench_forward(params, x, target):
    """Training path of DetBenchTrain.forward, fused into one pallas_call."""
    feats = level_features(x)
    g_sizes = [-(-f.shape[0] // PACK) for f in feats]     # grouped rows per level
    tile_g = min(MAX_TILE_G, _round_up(max(g_sizes), 16))
    g_pads = [_round_up(g, tile_g) for g in g_sizes]
    n_tiles = sum(g_pads) // tile_g

    w_packed = _pack_params(params)
    feat_p, tgt_p, level_ids = _pack_inputs(feats, target, g_pads, tile_g)

    partials = pl.pallas_call(
        _fused_bench_kernel,
        out_shape=jax.ShapeDtypeStruct((n_tiles, 8, LANES), jnp.float32),
        grid_spec=pltpu.PrefetchScalarGridSpec(
            num_scalar_prefetch=1,
            grid=(n_tiles,),
            in_specs=[
                pl.BlockSpec((tile_g, K_PACK), lambda g, lvl: (g, 0)),
                pl.BlockSpec((1, K_PACK, LANES), lambda g, lvl: (lvl[g], 0, 0)),
                pl.BlockSpec((tile_g, LANES), lambda g, lvl: (g, 0)),
            ],
            out_specs=pl.BlockSpec((1, 8, LANES), lambda g, lvl: (g, 0, 0)),
        ),
        compiler_params=pltpu.CompilerParams(
            dimension_semantics=("parallel",)),   # per-tile outputs -> megacore OK
    )(level_ids, feat_p, w_packed, tgt_p)

    # cross-lane / cross-tile reduction + normalization hoisted out of the kernel
    per_lane = jnp.sum(partials, axis=(0, 1))                         # [128]
    lane = jnp.arange(LANES)
    q = lane % HEAD_LANES
    in_pos = lane < PACK * HEAD_LANES
    is_cls_vec = jnp.logical_and(q < CLS_LANES, in_pos)
    is_box_vec = jnp.logical_and(
        jnp.logical_and(q >= CLS_LANES, q < HEAD_LANES), in_pos)
    cls_sum = jnp.sum(jnp.where(is_cls_vec, per_lane, 0.0))
    box_sum = jnp.sum(jnp.where(is_box_vec, per_lane, 0.0))

    npos_sum = jnp.sum(target["label_num_positives"]) + 1.0
    cls_loss = cls_sum / npos_sum
    box_loss = box_sum / (npos_sum * 4.0)
    loss = cls_loss + BOX_LOSS_WEIGHT * box_loss
    return {"loss": loss, "cls_loss": cls_loss, "box_loss": box_loss}


# ================================ parameters ====================================
def make_params(key):
    ks = jax.random.split(key, 1 + 2 * NUM_LEVELS)
    params = {
        "stem_w": 0.1 * jax.random.normal(ks[0], (IN_CH, FEAT_CH), jnp.float32),
        "stem_b": jnp.zeros((1, FEAT_CH), jnp.float32),
    }
    for l in range(NUM_LEVELS):
        params[f"cls_w_{l}"] = 0.05 * jax.random.normal(
            ks[1 + 2 * l], (FEAT_CH, NUM_ANCHORS * NUM_CLASSES), jnp.float32)
        # class-head prior bias (like efficientdet -log((1-0.01)/0.01))
        params[f"cls_b_{l}"] = jnp.full(
            (1, NUM_ANCHORS * NUM_CLASSES), -4.59512, jnp.float32)
        params[f"box_w_{l}"] = 0.05 * jax.random.normal(
            ks[2 + 2 * l], (FEAT_CH, NUM_ANCHORS * 4), jnp.float32)
        params[f"box_b_{l}"] = jnp.zeros((1, NUM_ANCHORS * 4), jnp.float32)
    return params


# ============================ pure-JAX reference ================================
def _ref_level_loss(logits, cls_t, box_o, box_t, npos_sum):
    non_neg = (cls_t >= 0).astype(jnp.float32)              # [N, 1]
    oh = jax.nn.one_hot(jnp.clip(cls_t[:, 0], 0, NUM_CLASSES - 1),
                        NUM_CLASSES) * non_neg
    pred_prob = jax.nn.sigmoid(logits)
    p_t = oh * pred_prob + (1.0 - oh) * (1.0 - pred_prob)
    alpha_factor = oh * ALPHA + (1.0 - oh) * (1.0 - ALPHA)
    one_m_pt = 1.0 - p_t
    modulating = one_m_pt * jnp.sqrt(one_m_pt)
    tgt_s = oh * (1.0 - LABEL_SMOOTHING) + 0.5 * LABEL_SMOOTHING
    ce = (jnp.maximum(logits, 0.0) - logits * tgt_s
          + jnp.log(1.0 + jnp.exp(-jnp.abs(logits))))
    fl = (1.0 / npos_sum) * alpha_factor * modulating * ce
    valid = (cls_t != -2).astype(jnp.float32)
    cls_loss = jnp.sum(fl * valid)
    err = box_o - box_t
    abs_err = jnp.abs(err)
    quad = jnp.minimum(abs_err, DELTA)
    lin = abs_err - quad
    hl = (0.5 * quad * quad + DELTA * lin) * (box_t != 0.0).astype(jnp.float32)
    box_loss = jnp.sum(hl) / (npos_sum * 4.0)
    return cls_loss, box_loss


def ref_forward(params, x, target):
    feats = level_features(x)
    npos_sum = jnp.sum(target["label_num_positives"]) + 1.0
    cls_losses, box_losses = [], []
    for l in range(NUM_LEVELS):
        flat = feats[l]
        stem = flat @ params["stem_w"] + params["stem_b"]
        logits = (stem @ params[f"cls_w_{l}"]
                  + params[f"cls_b_{l}"]).reshape(-1, NUM_CLASSES)
        box_o = (stem @ params[f"box_w_{l}"]
                 + params[f"box_b_{l}"]).reshape(-1, 4)
        cls_t = target[f"label_cls_{l}"].reshape(-1, 1).astype(jnp.int32)
        box_t = target[f"label_bbox_{l}"].reshape(-1, 4)
        cl, bl = _ref_level_loss(logits, cls_t, box_o, box_t, npos_sum)
        cls_losses.append(cl)
        box_losses.append(bl)
    cls_loss = jnp.sum(jnp.stack(cls_losses))
    box_loss = jnp.sum(jnp.stack(box_losses))
    return {"loss": cls_loss + BOX_LOSS_WEIGHT * box_loss,
            "cls_loss": cls_loss, "box_loss": box_loss}


# ============================== synthetic targets ===============================
def make_targets(key, B, H, W):
    target = {}
    num_pos = jnp.zeros((B,), jnp.float32)
    for l in range(NUM_LEVELS):
        s = STRIDES[l]
        h, w = H // s, W // s
        key, k1, k2, k3 = jax.random.split(key, 4)
        r = jax.random.uniform(k1, (B, h, w, NUM_ANCHORS))
        rand_cls = jax.random.randint(k2, (B, h, w, NUM_ANCHORS), 0, NUM_CLASSES)
        # ~15% positive, ~10% ignore (-2), rest background (-1)
        cls_t = jnp.where(r < 0.15, rand_cls,
                          jnp.where(r < 0.25, -2, -1)).astype(jnp.int32)
        box_t = jnp.where(
            (cls_t >= 0)[..., None],
            jax.random.normal(k3, (B, h, w, NUM_ANCHORS, 4)),
            0.0).astype(jnp.float32)
        target[f"label_cls_{l}"] = cls_t
        target[f"label_bbox_{l}"] = box_t
        num_pos = num_pos + jnp.sum((cls_t >= 0).astype(jnp.float32), axis=(1, 2, 3))
    target["label_num_positives"] = num_pos
    return target


# ==================================== main ======================================
if __name__ == "__main__":
    key = jax.random.PRNGKey(0)
    kx, kp, kt = jax.random.split(key, 3)

    B, H, W = 2, 32, 32
    x = jax.random.normal(kx, (B, IN_CH, H, W), jnp.float32)   # NCHW (PyTorch conv.)
    params = make_params(kp)
    target = make_targets(kt, B, H, W)

    out = jax.jit(det_bench_forward)(params, x, target)
    jax.block_until_ready(out)

    ref = ref_forward(params, x, target)
    # bf16 MXU operands + stem/head weight & bias folding -> looser tolerance
    for k in ("loss", "cls_loss", "box_loss"):
        assert jnp.allclose(out[k], ref[k], rtol=5e-3, atol=2e-4), \
            (k, float(out[k]), float(ref[k]))

    print("KERNEL_OK")
</pallas_src>

<mosaic_0001>
module attributes {stable_mosaic.version = 11 : i64} {
  func.func @_fused_bench_kernel(%arg0: i32, %arg1: memref<3xi32, #tpu.memory_space<smem>>, %arg2: memref<48x16xbf16, #tpu.memory_space<vmem>>, %arg3: memref<1x16x128xbf16, #tpu.memory_space<vmem>>, %arg4: memref<48x128xf32, #tpu.memory_space<vmem>>, %arg5: memref<1x8x128xf32, #tpu.memory_space<vmem>>) attributes {dimension_semantics = [#tpu.dimension_semantics<parallel>], iteration_bounds = array<i64: 3>, scalar_prefetch = 1 : i64, scratch_operands = 0 : i64, tpu.core_type = #tpu.core_type<tc>, window_params = [{transform_indices = @transform_0, window_bounds = array<i64: 48, 16>}, {transform_indices = @transform_1, window_bounds = array<i64: 1, 16, 128>}, {transform_indices = @transform_2, window_bounds = array<i64: 48, 128>}, {transform_indices = @transform_3, window_bounds = array<i64: 1, 8, 128>}]} {
    %c0 = arith.constant 0 : index
    %c0_0 = arith.constant 0 : index
    %0 = vector.load %arg2[%c0, %c0_0] : memref<48x16xbf16, #tpu.memory_space<vmem>>, vector<48x16xbf16>
    %c0_1 = arith.constant 0 : index
    %c0_2 = arith.constant 0 : index
    %c0_3 = arith.constant 0 : index
    %1 = vector.load %arg3[%c0_1, %c0_2, %c0_3] : memref<1x16x128xbf16, #tpu.memory_space<vmem>>, vector<1x16x128xbf16>
    %2 = vector.shape_cast %1 : vector<1x16x128xbf16> to vector<16x128xbf16>
    %cst = arith.constant dense<0.000000e+00> : vector<48x128xf32>
    %3 = tpu.matmul %0, %2, %cst {dimension_numbers = #tpu.dot_dimension_numbers<[1], [0], [0], [1], [0, 0, 1, 1], [], []>} : vector<48x16xbf16>, vector<16x128xbf16>, vector<48x128xf32> -> vector<48x128xf32>
    %c0_4 = arith.constant 0 : index
    %c0_5 = arith.constant 0 : index
    %4 = vector.load %arg4[%c0_4, %c0_5] : memref<48x128xf32, #tpu.memory_space<vmem>>, vector<48x128xf32>
    %5 = tpu.iota {dimensions = array<i32: 1>} : vector<1x128xi32>
    %c0_i32 = arith.constant 0 : i32
    %6 = vector.broadcast %c0_i32 : i32 to vector<1x128xi32>
    %c36_i32 = arith.constant 36 : i32
    %7 = vector.broadcast %c36_i32 : i32 to vector<1x128xi32>
    %8 = arith.cmpi sge, %5, %7 : vector<1x128xi32>
    %c1_i32 = arith.constant 1 : i32
    %c0_i32_6 = arith.constant 0 : i32
    %9 = vector.broadcast %c1_i32 : i32 to vector<1x128xi32>
    %10 = vector.broadcast %c0_i32_6 : i32 to vector<1x128xi32>
    %11 = arith.select %8, %9, %10 : vector<1x128xi1>, vector<1x128xi32>
    %12 = arith.addi %6, %11 : vector<1x128xi32>
    %c72_i32 = arith.constant 72 : i32
    %13 = vector.broadcast %c72_i32 : i32 to vector<1x128xi32>
    %14 = arith.cmpi sge, %5, %13 : vector<1x128xi32>
    %c1_i32_7 = arith.constant 1 : i32
    %c0_i32_8 = arith.constant 0 : i32
    %15 = vector.broadcast %c1_i32_7 : i32 to vector<1x128xi32>
    %16 = vector.broadcast %c0_i32_8 : i32 to vector<1x128xi32>
    %17 = arith.select %14, %15, %16 : vector<1x128xi1>, vector<1x128xi32>
    %18 = arith.addi %12, %17 : vector<1x128xi32>
    %c36_i32_9 = arith.constant 36 : i32
    %19 = vector.broadcast %c36_i32_9 : i32 to vector<1x128xi32>
    %20 = arith.muli %18, %19 : vector<1x128xi32>
    %21 = arith.subi %5, %20 : vector<1x128xi32>
    %c24_i32 = arith.constant 24 : i32
    %22 = vector.broadcast %c24_i32 : i32 to vector<1x128xi32>
    %23 = arith.cmpi slt, %21, %22 : vector<1x128xi32>
    %c24_i32_10 = arith.constant 24 : i32
    %24 = vector.broadcast %c24_i32_10 : i32 to vector<1x128xi32>
    %25 = arith.cmpi sge, %21, %24 : vector<1x128xi32>
    %c36_i32_11 = arith.constant 36 : i32
    %26 = vector.broadcast %c36_i32_11 : i32 to vector<1x128xi32>
    %27 = arith.cmpi slt, %21, %26 : vector<1x128xi32>
    %28 = arith.andi %25, %27 : vector<1x128xi1>
    %c7_i32 = arith.constant 7 : i32
    %29 = vector.broadcast %c7_i32 : i32 to vector<1x128xi32>
    %30 = arith.andi %21, %29 : vector<1x128xi32>
    %31 = arith.sitofp %30 : vector<1x128xi32> to vector<1x128xf32>
    %cst_12 = arith.constant -2.000000e+00 : f32
    %32 = vector.broadcast %cst_12 : f32 to vector<48x128xf32>
    %33 = arith.cmpf one, %4, %32 : vector<48x128xf32>
    %34 = vector.broadcast %23 : vector<1x128xi1> to vector<48x128xi1>
    %35 = arith.andi %34, %33 : vector<48x128xi1>
    %cst_13 = arith.constant 1.000000e+00 : f32
    %cst_14 = arith.constant 0.000000e+00 : f32
    %36 = vector.broadcast %cst_13 : f32 to vector<48x128xf32>
    %37 = vector.broadcast %cst_14 : f32 to vector<48x128xf32>
    %38 = arith.select %35, %36, %37 : vector<48x128xi1>, vector<48x128xf32>
    %39 = vector.broadcast %31 : vector<1x128xf32> to vector<48x128xf32>
    %40 = arith.cmpf oeq, %39, %4 : vector<48x128xf32>
    %cst_15 = arith.constant 0.000000e+00 : f32
    %41 = vector.broadcast %cst_15 : f32 to vector<48x128xf32>
    %42 = arith.cmpf oge, %4, %41 : vector<48x128xf32>
    %43 = arith.andi %40, %42 : vector<48x128xi1>
    %cst_16 = arith.constant 1.000000e+00 : f32
    %cst_17 = arith.constant 0.000000e+00 : f32
    %44 = vector.broadcast %cst_16 : f32 to vector<48x128xf32>
    %45 = vector.broadcast %cst_17 : f32 to vector<48x128xf32>
    %46 = arith.select %43, %44, %45 : vector<48x128xi1>, vector<48x128xf32>
    %47 = arith.negf %3 : vector<48x128xf32>
    %48 = math.exp %47 : vector<48x128xf32>
    %cst_18 = arith.constant 1.000000e+00 : f32
    %49 = vector.broadcast %cst_18 : f32 to vector<48x128xf32>
    %50 = arith.addf %49, %48 : vector<48x128xf32>
    %51 = arith.divf %49, %50 : vector<48x128xf32>
    %cst_19 = arith.constant 1.000000e+00 : f32
    %52 = vector.broadcast %cst_19 : f32 to vector<48x128xf32>
    %53 = arith.subf %52, %46 : vector<48x128xf32>
    %54 = arith.mulf %46, %51 : vector<48x128xf32>
    %cst_20 = arith.constant 1.000000e+00 : f32
    %55 = vector.broadcast %cst_20 : f32 to vector<48x128xf32>
    %56 = arith.subf %55, %51 : vector<48x128xf32>
    %57 = arith.mulf %53, %56 : vector<48x128xf32>
    %58 = arith.addf %54, %57 : vector<48x128xf32>
    %cst_21 = arith.constant 2.500000e-01 : f32
    %59 = vector.broadcast %cst_21 : f32 to vector<48x128xf32>
    %60 = arith.mulf %46, %59 : vector<48x128xf32>
    %cst_22 = arith.constant 7.500000e-01 : f32
    %61 = vector.broadcast %cst_22 : f32 to vector<48x128xf32>
    %62 = arith.mulf %53, %61 : vector<48x128xf32>
    %63 = arith.addf %60, %62 : vector<48x128xf32>
    %cst_23 = arith.constant 1.000000e+00 : f32
    %64 = vector.broadcast %cst_23 : f32 to vector<48x128xf32>
    %65 = arith.subf %64, %58 : vector<48x128xf32>
    %66 = math.sqrt %65 : vector<48x128xf32>
    %67 = arith.mulf %65, %66 : vector<48x128xf32>
    %cst_24 = arith.constant 0.000000e+00 : f32
    %68 = vector.broadcast %cst_24 : f32 to vector<48x128xf32>
    %69 = arith.maximumf %3, %68 : vector<48x128xf32>
    %70 = arith.mulf %3, %46 : vector<48x128xf32>
    %71 = arith.subf %69, %70 : vector<48x128xf32>
    %cst_25 = arith.constant 0.000000e+00 : f32
    %72 = vector.broadcast %cst_25 : f32 to vector<48x128xf32>
    %73 = arith.cmpf oge, %3, %72 : vector<48x128xf32>
    %cst_26 = arith.constant 1.000000e+00 : f32
    %74 = vector.broadcast %cst_26 : f32 to vector<48x128xf32>
    %75 = arith.subf %74, %51 : vector<48x128xf32>
    %76 = arith.select %73, %51, %75 : vector<48x128xi1>, vector<48x128xf32>
    %77 = math.log %76 : vector<48x128xf32>
    %78 = arith.subf %71, %77 : vector<48x128xf32>
    %79 = arith.mulf %63, %67 : vector<48x128xf32>
    %80 = arith.mulf %79, %78 : vector<48x128xf32>
    %81 = arith.mulf %80, %38 : vector<48x128xf32>
    %cst_27 = arith.constant 0.000000e+00 : f32
    %82 = vector.broadcast %cst_27 : f32 to vector<48x128xf32>
    %83 = arith.cmpf one, %4, %82 : vector<48x128xf32>
    %84 = vector.broadcast %28 : vector<1x128xi1> to vector<48x128xi1>
    %85 = arith.andi %84, %83 : vector<48x128xi1>
    %cst_28 = arith.constant 1.000000e+00 : f32
    %cst_29 = arith.constant 0.000000e+00 : f32
    %86 = vector.broadcast %cst_28 : f32 to vector<48x128xf32>
    %87 = vector.broadcast %cst_29 : f32 to vector<48x128xf32>
    %88 = arith.select %85, %86, %87 : vector<48x128xi1>, vector<48x128xf32>
    %89 = arith.subf %3, %4 : vector<48x128xf32>
    %90 = math.absf %89 : vector<48x128xf32>
    %cst_30 = arith.constant 1.000000e-01 : f32
    %91 = vector.broadcast %cst_30 : f32 to vector<48x128xf32>
    %92 = arith.minimumf %90, %91 : vector<48x128xf32>
    %93 = arith.subf %90, %92 : vector<48x128xf32>
    %cst_31 = arith.constant 5.000000e-01 : f32
    %94 = vector.broadcast %cst_31 : f32 to vector<48x128xf32>
    %95 = arith.mulf %94, %92 : vector<48x128xf32>
    %96 = arith.mulf %95, %92 : vector<48x128xf32>
    %cst_32 = arith.constant 1.000000e-01 : f32
    %97 = vector.broadcast %cst_32 : f32 to vector<48x128xf32>
    %98 = arith.mulf %97, %93 : vector<48x128xf32>
    %99 = arith.addf %96, %98 : vector<48x128xf32>
    %100 = arith.mulf %99, %88 : vector<48x128xf32>
    %101 = arith.addf %81, %100 : vector<48x128xf32>
    %102 = vector.extract_strided_slice %101 {offsets = [0, 0], sizes = [8, 128], strides = [1, 1]} : vector<48x128xf32> to vector<8x128xf32>
    %103 = vector.extract_strided_slice %101 {offsets = [8, 0], sizes = [8, 128], strides = [1, 1]} : vector<48x128xf32> to vector<8x128xf32>
    %104 = arith.addf %102, %103 : vector<8x128xf32>
    %105 = vector.extract_strided_slice %101 {offsets = [16, 0], sizes = [8, 128], strides = [1, 1]} : vector<48x128xf32> to vector<8x128xf32>
    %106 = arith.addf %104, %105 : vector<8x128xf32>
    %107 = vector.extract_strided_slice %101 {offsets = [24, 0], sizes = [8, 128], strides = [1, 1]} : vector<48x128xf32> to vector<8x128xf32>
    %108 = arith.addf %106, %107 : vector<8x128xf32>
    %109 = vector.extract_strided_slice %101 {offsets = [32, 0], sizes = [8, 128], strides = [1, 1]} : vector<48x128xf32> to vector<8x128xf32>
    %110 = arith.addf %108, %109 : vector<8x128xf32>
    %111 = vector.extract_strided_slice %101 {offsets = [40, 0], sizes = [8, 128], strides = [1, 1]} : vector<48x128xf32> to vector<8x128xf32>
    %112 = arith.addf %110, %111 : vector<8x128xf32>
    %c0_33 = arith.constant 0 : index
    %c0_34 = arith.constant 0 : index
    %c0_35 = arith.constant 0 : index
    %113 = vector.load %arg5[%c0_33, %c0_34, %c0_35] : memref<1x8x128xf32, #tpu.memory_space<vmem>>, vector<1x8x128xf32>
    %114 = vector.shape_cast %113 : vector<1x8x128xf32> to vector<8x128xf32>
    %115 = vector.shape_cast %112 : vector<8x128xf32> to vector<1x8x128xf32>
    tpu.vector_store %arg5[%c0_33, %c0_34, %c0_35], %115 {strides = array<i32>} : memref<1x8x128xf32, #tpu.memory_space<vmem>>, vector<1x8x128xf32>,
    return
  }
  func.func @transform_0(%arg0: i32, %arg1: memref<3xi32, #tpu.memory_space<smem>>) -> (i32, i32) {
    %c0_i32 = arith.constant 0 : i32
    %c0_i32_0 = arith.constant 0 : i32
    return %arg0, %c0_i32 : i32, i32
  }
  func.func @transform_1(%arg0: i32, %arg1: memref<3xi32, #tpu.memory_space<smem>>) -> (i32, i32, i32) {
    %0 = arith.index_cast %arg0 : i32 to index
    %1 = memref.load %arg1[%0] : memref<3xi32, #tpu.memory_space<smem>>
    %c0_i32 = arith.constant 0 : i32
    %c0_i32_0 = arith.constant 0 : i32
    %c0_i32_1 = arith.constant 0 : i32
    return %1, %c0_i32, %c0_i32_0 : i32, i32, i32
  }
  func.func @transform_2(%arg0: i32, %arg1: memref<3xi32, #tpu.memory_space<smem>>) -> (i32, i32) {
    %c0_i32 = arith.constant 0 : i32
    %c0_i32_0 = arith.constant 0 : i32
    return %arg0, %c0_i32 : i32, i32
  }
  func.func @transform_3(%arg0: i32, %arg1: memref<3xi32, #tpu.memory_space<smem>>) -> (i32, i32, i32) {
    %c0_i32 = arith.constant 0 : i32
    %c0_i32_0 = arith.constant 0 : i32
    %c0_i32_1 = arith.constant 0 : i32
    return %arg0, %c0_i32, %c0_i32_0 : i32, i32, i32
  }
}

</mosaic_0001>

<llo_original>
// kernel: det_bench_forward.1
$region0: #{det_bench_forward.1}
  #allocation0 [shape = 'u32[]', space=smem, size = 0x4, offset = 0x4, fixed_abs, tag = 'smem constant byte address 0x4 - core index']
  #allocation1 [shape = 'u32[144,128]{1,0:T(1,128)}', space=vmem, size = 0x12000, scoped, tag = 'internal scratch']
  #allocation2 [shape = 's32[1]{0}', space=sflag, size = 0x4, scoped, tag = 'scoped memory for det_bench_forward.1']
  #allocation3 [shape = 'u8[512]{0}', space=smem, size = 0x200, scoped, tag = 'prefetched SMEM operand 0']
  %s0 = inlined_call_operand.vmem [shape: s32[3], index: 0, kind: input, shape index: {}]
  %s1 = inlined_call_operand.vmem [shape: bf16[144,16], index: 1, kind: input, shape index: {}]
  %s2 = inlined_call_operand.vmem [shape: bf16[3,16,128], index: 2, kind: input, shape index: {}]
  %s3 = inlined_call_operand.vmem [shape: f32[144,128], index: 3, kind: input, shape index: {}]
  %s4 = inlined_call_operand.vmem [shape: f32[3,8,128], index: 4, kind: output, shape index: {}]
  %s5 = sld [smem:[#allocation0]]
  $region45: #{det_bench_forward.1} parent=0
    _
  %s7 = ssub.s32 1, %s5
  %s8 = scalar_select 0, %s7, %s5
  %s9 = sshll.u32 %s0, 4
  %s10 = int_to_ptr.vmem [resolvable:$true] %s9
  %12 = dma.vmem_to_smem %s10, 16, [#allocation3], [#allocation2]
  %13 = dma.done [#allocation2], 16
  %14 = sfence
  loop: start=0, step=1, limit=5
  $region2: #{det_bench_forward.1} parent=0 // loop_pre_header
    _
  $region3: #{det_bench_forward.1} parent=0 // loop_header
    %s16 = sphi 0, %s20
    %p17 = scmp.ge.s32.totalorder %s16, 5
    %s26 = sphi 0, %s28
    %s29 = sphi 0, %s26
    %s30 = sphi 0, %s29
    %s46 = sphi 0, %s30
    %s54 = sphi 0, %s56
    %s57 = sphi 0, %s54
    %s58 = sphi 0, %s57
    %s74 = sphi 0, %s58
    %s80 = sphi 0, %s82
    %s83 = sphi 0, %s80
    %s84 = sphi 0, %s83
    %s100 = sphi 0, %s84
    %s106 = sphi 0, %s108
    %s109 = sphi 0, %s106
    %s110 = sphi 0, %s109
    %s126 = sphi 0, %s110
  $region4: #{det_bench_forward.1} parent=0 // loop_header_branch
    %19 = sbr.rel (%p17) target = $region8
  $region5: #{det_bench_forward.1} parent=0 // loop_body
    %s21 = ssub.s32 %s16, 1
    %s22 = ssub.s32 %s16, 2
    %s23 = sadd.s32 %s16, 1
    %s24 = ssub.s32 %s16, %s23
    %p25 = scmp.eq.s32.totalorder %s24, 0
    %s27 = sadd.s32 %s26, 1
    %s28 = scalar_select %p25, %s26, %s27
    %p31 = pneg %p25
    %p32 = scmp.eq.s32.totalorder %s16, 2
    %p33 = por %p31, %p32
    %p34 = scmp.ne.s32.totalorder %s26, %s29
    %p35 = scmp.eq.s32.totalorder %s16, 0
    %p36 = por %p34, %p35
    %p37 = scmp.ne.s32.totalorder %s26, %s29
    %p38 = scmp.eq.s32.totalorder %s21, 2
    %p39 = por %p37, %p38
    %p40 = scmp.ne.s32.totalorder %s29, %s30
    %p41 = scmp.eq.s32.totalorder %s21, 0
    %p42 = por %p40, %p41
    %p43 = scmp.ne.s32.totalorder %s29, %s30
    %p44 = scmp.eq.s32.totalorder %s22, 2
    %p45 = por %p43, %p44
    %p47 = scmp.ne.s32.totalorder %s30, %s46
    %p48 = scmp.eq.s32.totalorder %s22, 0
    %p49 = por %p47, %p48
    %s50 = sld [smem:[#allocation3 + %s16]]
    %s51 = sld [smem:[#allocation3 + %s23]]
    %s52 = ssub.s32 %s50, %s51
    %p53 = scmp.eq.s32.totalorder %s52, 0
    %s55 = sadd.s32 %s54, 1
    %s56 = scalar_select %p53, %s54, %s55
    %p59 = pneg %p53
    %p60 = scmp.eq.s32.totalorder %s16, 2
    %p61 = por %p59, %p60
    %p62 = scmp.ne.s32.totalorder %s54, %s57
    %p63 = scmp.eq.s32.totalorder %s16, 0
    %p64 = por %p62, %p63
    %p65 = scmp.ne.s32.totalorder %s54, %s57
    %p66 = scmp.eq.s32.totalorder %s21, 2
    %p67 = por %p65, %p66
    %p68 = scmp.ne.s32.totalorder %s57, %s58
    %p69 = scmp.eq.s32.totalorder %s21, 0
    %p70 = por %p68, %p69
    %p71 = scmp.ne.s32.totalorder %s57, %s58
    %p72 = scmp.eq.s32.totalorder %s22, 2
    %p73 = por %p71, %p72
    %p75 = scmp.ne.s32.totalorder %s58, %s74
    %p76 = scmp.eq.s32.totalorder %s22, 0
    %p77 = por %p75, %p76
    %s78 = ssub.s32 %s16, %s23
    %p79 = scmp.eq.s32.totalorder %s78, 0
    %s81 = sadd.s32 %s80, 1
    %s82 = scalar_select %p79, %s80, %s81
    %p85 = pneg %p79
    %p86 = scmp.eq.s32.totalorder %s16, 2
    %p87 = por %p85, %p86
    %p88 = scmp.ne.s32.totalorder %s80, %s83
    %p89 = scmp.eq.s32.totalorder %s16, 0
    %p90 = por %p88, %p89
    %p91 = scmp.ne.s32.totalorder %s80, %s83
    %p92 = scmp.eq.s32.totalorder %s21, 2
    %p93 = por %p91, %p92
    %p94 = scmp.ne.s32.totalorder %s83, %s84
    %p95 = scmp.eq.s32.totalorder %s21, 0
    %p96 = por %p94, %p95
    %p97 = scmp.ne.s32.totalorder %s83, %s84
    %p98 = scmp.eq.s32.totalorder %s22, 2
    %p99 = por %p97, %p98
    %p101 = scmp.ne.s32.totalorder %s84, %s100
    %p102 = scmp.eq.s32.totalorder %s22, 0
    %p103 = por %p101, %p102
    %s104 = ssub.s32 %s16, %s23
    %p105 = scmp.eq.s32.totalorder %s104, 0
    %s107 = sadd.s32 %s106, 1
    %s108 = scalar_select %p105, %s106, %s107
    %p111 = pneg %p105
    %p112 = scmp.eq.s32.totalorder %s16, 2
    %p113 = por %p111, %p112
    %p114 = scmp.ne.s32.totalorder %s106, %s109
    %p115 = scmp.eq.s32.totalorder %s16, 0
    %p116 = por %p114, %p115
    %p117 = scmp.ne.s32.totalorder %s106, %s109
    %p118 = scmp.eq.s32.totalorder %s21, 2
    %p119 = por %p117, %p118
    %p120 = scmp.ne.s32.totalorder %s109, %s110
    %p121 = scmp.eq.s32.totalorder %s21, 0
    %p122 = por %p120, %p121
    %p123 = scmp.ne.s32.totalorder %s109, %s110
    %p124 = scmp.eq.s32.totalorder %s22, 2
    %p125 = por %p123, %p124
    %p127 = scmp.ne.s32.totalorder %s110, %s126
    %p128 = scmp.eq.s32.totalorder %s22, 0
    %p129 = por %p127, %p128
    %p130 = scmp.le.s32.totalorder 1, %s16
    %p131 = scmp.lt.s32.totalorder %s16, 4
    %p132 = pnand %p130, %p131
    %p133 = pneg %p132
    // Predicated region
    $region9: #{det_bench_forward.1} parent=5 // pred_check
      _
    $region10: #{det_bench_forward.1} parent=5 // pred_check_branch
      %135 = sbr.rel (%p132) target = $region12
    $region11: #{det_bench_forward.1} parent=5 // pred_region
      %s136 = ssub.s32 %s16, 1
    $region12: #{det_bench_forward.1} parent=5 // pred_fallthru
      _
    %p137 = scmp.lt.s32.totalorder %s16, 3
    // Predicated region
    $region13: #{det_bench_forward.1} parent=5 // pred_check
      %p138 = pneg %p137
    $region14: #{det_bench_forward.1} parent=5 // pred_check_branch
      %140 = sbr.rel (%p138) target = $region16
    $region15: #{det_bench_forward.1} parent=5 // pred_region
      // Predicated region
      $region17: #{det_bench_forward.1} parent=15 // pred_check
        %p141 = pneg %p36
      $region18: #{det_bench_forward.1} parent=15 // pred_check_branch
        %143 = sbr.rel (%p141) target = $region20
      $region19: #{det_bench_forward.1} parent=15 // pred_region
        %s144 = smul.u32 6, %s16
        %p145 = scmp.lt.s32.totalorder %s144, 17
        %s146 = scalar_select %p145, %s144, 17
        %s147 = smul.addr %s146, 4
        %s148 = scalar_lea.vmem %s1, %s147
        %s149 = smul.u32 6, %s16
      $region20: #{det_bench_forward.1} parent=15 // pred_fallthru
        _
      // Predicated region
      $region21: #{det_bench_forward.1} parent=15 // pred_check
        %p150 = pneg %p64
      $region22: #{det_bench_forward.1} parent=15 // pred_check_branch
        %152 = sbr.rel (%p150) target = $region24
      $region23: #{det_bench_forward.1} parent=15 // pred_region
        %s153 = sld [smem:[#allocation3 + %s16]]
        %p154 = scmp.lt.s32.totalorder %s153, 2
        %s155 = scalar_select %p154, %s153, 2
        %s156 = smul.addr %s155, 2
        %s157 = smul.addr %s156, 4
        %s158 = scalar_lea.vmem %s2, %s157
        %s159 = sld [smem:[#allocation3 + %s16]]
      $region24: #{det_bench_forward.1} parent=15 // pred_fallthru
        _
      // Predicated region
      $region25: #{det_bench_forward.1} parent=15 // pred_check
        %p160 = pneg %p90
      $region26: #{det_bench_forward.1} parent=15 // pred_check_branch
        %162 = sbr.rel (%p160) target = $region28
      $region27: #{det_bench_forward.1} parent=15 // pred_region
        %s163 = smul.u32 6, %s16
        %p164 = scmp.lt.s32.totalorder %s163, 17
        %s165 = scalar_select %p164, %s163, 17
        %s166 = smul.addr %s165, 8
        %s167 = scalar_lea.vmem %s3, %s166
        %s168 = smul.u32 6, %s16
      $region28: #{det_bench_forward.1} parent=15 // pred_fallthru
        _
    $region16: #{det_bench_forward.1} parent=5 // pred_fallthru
      _
    %p169 = scmp.le.s32.totalorder 1, %s16
    %p170 = scmp.lt.s32.totalorder %s16, 4
    %p171 = pnand %p169, %p170
    %p172 = pneg %p171
    // Predicated region
    $region29: #{det_bench_forward.1} parent=5 // pred_check
      _
    $region30: #{det_bench_forward.1} parent=5 // pred_check_branch
      %174 = sbr.rel (%p171) target = $region32
    $region31: #{det_bench_forward.1} parent=5 // pred_region
      %s175 = ssub.s32 %s16, 1
      %s176 = smul.u32 6, %s21
      %p177 = scmp.lt.s32.totalorder %s176, 17
      %s178 = scalar_select %p177, %s176, 17
      %s179 = smul.addr %s178, 4
      %s180 = scalar_lea.vmem %s1, %s179
      %p181 = pneg %p42
      %p182 = pneg %p39
      %s183 = sld [smem:[#allocation3 + %s21]]
      %p184 = scmp.lt.s32.totalorder %s183, 2
      %s185 = scalar_select %p184, %s183, 2
      %s186 = smul.addr %s185, 2
      %s187 = smul.addr %s186, 4
      %s188 = scalar_lea.vmem %s2, %s187
      %p189 = pneg %p70
      %p190 = pneg %p67
      %s191 = smul.u32 6, %s21
      %p192 = scmp.lt.s32.totalorder %s191, 17
      %s193 = scalar_select %p192, %s191, 17
      %s194 = smul.addr %s193, 8
      %s195 = scalar_lea.vmem %s3, %s194
      %p196 = pneg %p96
      %p197 = pneg %p93
      %p198 = pneg %p122
      %p199 = pneg %p119
      %p200 = scmp.lt.s32.totalorder %s21, 2
      %s201 = scalar_select %p200, %s21, 2
      %s202 = smul.addr %s201, 8
      %s203 = scalar_lea.vmem %s4, %s202
      %s204 = smul.u32 6, %s21
      %p205 = scmp.lt.s32.totalorder %s204, 17
      %s206 = scalar_select %p205, %s204, 17
      %s207 = smul.addr %s206, 4
      %s208 = scalar_lea.vmem %s1, %s207
      %s209 = smul.u32 6, %s21
      %s210 = sld [smem:[#allocation3 + %s21]]
      %p211 = scmp.lt.s32.totalorder %s210, 2
      %s212 = scalar_select %p211, %s210, 2
      %s213 = smul.addr %s212, 2
      %s214 = smul.addr %s213, 4
      %s215 = scalar_lea.vmem %s2, %s214
      %s216 = sld [smem:[#allocation3 + %s21]]
      %s217 = smul.u32 6, %s21
      %p218 = scmp.lt.s32.totalorder %s217, 17
      %s219 = scalar_select %p218, %s217, 17
      %s220 = smul.addr %s219, 8
      %s221 = scalar_lea.vmem %s3, %s220
      %s222 = smul.u32 6, %s21
      %p223 = scmp.lt.s32.totalorder %s21, 2
      %s224 = scalar_select %p223, %s21, 2
      %s225 = smul.addr %s224, 8
      %s226 = scalar_lea.vmem %s4, %s225
      %v228 = vld [vmem:[%s208] sm:$0xf]
      %v229 = vld [vmem:[%s208 + $0x4] sm:$0xf]
      %v230 = vld [vmem:[%s208 + $0x8] sm:$0xf]
      %v231 = vld [vmem:[%s208 + $0xc] sm:$0xf]
      %v232 = vld [vmem:[%s208 + $0x10] sm:$0xf]
      %v233 = vld [vmem:[%s208 + $0x14] sm:$0xf]
      %v234 = vld [vmem:[%s215] sm:$0xf]
      %v235 = vld [vmem:[%s215 + $0x4] sm:$0xf]
      %v242 = vunpack.c.l.b16 %v228
      %v243 = vunpack.c.l.b16 %v229
      %v244 = vunpack.c.l.b16 %v230
      %v245 = vunpack.c.l.b16 %v231
      %v246 = vunpack.c.l.b16 %v232
      %v247 = vunpack.c.l.b16 %v233
      %v248 = vpack.c.b16 %v243, %v242
      %v249 = vpack.c.b16 %v245, %v244
      %v250 = vpack.c.b16 %v247, %v246
      %v253 = vunpack.c.l.b16 %v234
      %v254 = vunpack.c.l.b16 %v235
      %v255 = vpack.c.b16 %v254, %v253
      %vm257 = vcmask 130048
      %v259 = vsel %vm257, %v248, 0
      %v262 = vsel %vm257, %v249, 0
      %v265 = vsel %vm257, %v250, 0
      %267 = vmatprep.subr.bf16.mxu0 0
      %268 = vmatpush1.bf16.msra.mxu0 0
      %269 = vmatprep.subr.bf16.mxu0 0
      %270 = vmatpush1.bf16.msra.mxu0 0
      %271 = vmatprep.subr.bf16.mxu0 0
      %272 = vmatpush1.bf16.msra.mxu0 0
      %273 = vmatprep.subr.bf16.mxu0 0
      %274 = vmatpush1.bf16.msra.mxu0 0
      %275 = vmatprep.subr.bf16.mxu0 0
      %276 = vmatpush1.bf16.msra.mxu0 0
      %277 = vmatprep.subr.bf16.mxu0 0
      %278 = vmatpush1.bf16.msra.mxu0 0
      %279 = vmatprep.subr.bf16.mxu0 0
      %280 = vmatpush1.bf16.msra.mxu0 0
      %281 = vmatprep.subr.bf16.mxu0 0
      %282 = vmatpush1.bf16.msra.mxu0 %v255
      %283 = vmatprep.subr.bf16.mxu0 0
      %284 = vmatpush2.bf16.msra.mxu0 0
      %285 = vmatprep.subr.bf16.mxu0 0
      %286 = vmatpush2.bf16.msra.mxu0 0
      %287 = vmatprep.subr.bf16.mxu0 0
      %288 = vmatpush2.bf16.msra.mxu0 0
      %289 = vmatprep.subr.bf16.mxu0 0
      %290 = vmatpush2.bf16.msra.mxu0 0
      %291 = vmatprep.subr.bf16.mxu0 0
      %292 = vmatpush2.bf16.msra.mxu0 0
      %293 = vmatprep.subr.bf16.mxu0 0
      %294 = vmatpush2.bf16.msra.mxu0 0
      %295 = vmatprep.subr.bf16.mxu0 0
      %296 = vmatpush2.bf16.msra.mxu0 0
      %297 = vmatprep.subr.bf16.mxu0 0
      %298 = vmatpush2.bf16.msra.mxu0 0
      %299 = vmatprep.mubr.bf16.mxu0 0
      %300 = vmatmul.mubr.bf16.gmra.mxu0 %v259
      %v301 = vpop.f32.mrf.mxu0
      %v302 = vadd.f32 0.0, %v301
      %v303 = vpop.f32.mrf.mxu0
      %v304 = vpop.f32.mrf.mxu0
      %v305 = vadd.f32 0.0, %v304
      %v306 = vpop.f32.mrf.mxu0
      %307 = vmatprep.mubr.bf16.mxu0 0
      %308 = vmatmul.mubr.bf16.gmra.mxu0 %v262
      %v309 = vpop.f32.mrf.mxu0
      %v310 = vadd.f32 0.0, %v309
      %v311 = vpop.f32.mrf.mxu0
      %v312 = vpop.f32.mrf.mxu0
      %v313 = vadd.f32 0.0, %v312
      %v314 = vpop.f32.mrf.mxu0
      %315 = vmatprep.mubr.bf16.mxu0 0
      %316 = vmatmul.mubr.bf16.gmra.mxu0 %v265
      %v317 = vpop.f32.mrf.mxu0
      %v318 = vadd.f32 0.0, %v317
      %v319 = vpop.f32.mrf.mxu0
      %v320 = vpop.f32.mrf.mxu0
      %v321 = vadd.f32 0.0, %v320
      %v322 = vpop.f32.mrf.mxu0
      %323 = vdwg.mxu0
      %v324 = vld [vmem:[%s221] sm:$0xff]
      %v325 = vld [vmem:[%s221 + $0x8] sm:$0xff]
      %v326 = vld [vmem:[%s221 + $0x10] sm:$0xff]
      %v327 = vld [vmem:[%s221 + $0x18] sm:$0xff]
      %v328 = vld [vmem:[%s221 + $0x20] sm:$0xff]
      %v329 = vld [vmem:[%s221 + $0x28] sm:$0xff]
      %v330 = vlaneseq
      %v331 = vand.u32 %v330, 127
      %vm332 = vcmp.ge.s32.totalorder %v331, 36
      %v333 = vsel %vm332, 1, 0
      %vm334 = vcmp.ge.s32.totalorder %v331, 72
      %v335 = vsel %vm334, 1, 0
      %v336 = vadd.s32 %v333, %v335
      %v337 = vmul.u32 %v336, 36
      %v338 = vsub.s32 %v331, %v337
      %vm339 = vcmp.lt.s32.totalorder %v338, 24
      %vm340 = vcmp.ge.s32.totalorder %v338, 24
      %vm341 = vcmp.lt.s32.totalorder %v338, 36
      %vm342 = vmand %vm340, %vm341
      %v343 = vand.u32 %v338, 7
      %v344 = vcvt.s32.f32 %v343
      %vm345 = vcmp.ne.f32.partialorder %v324, -2.0
      %vm346 = vcmp.ne.f32.partialorder %v325, -2.0
      %vm347 = vcmp.ne.f32.partialorder %v326, -2.0
      %vm348 = vcmp.ne.f32.partialorder %v327, -2.0
      %vm349 = vcmp.ne.f32.partialorder %v328, -2.0
      %vm350 = vcmp.ne.f32.partialorder %v329, -2.0
      %v351 = vsel %vm339, 1, 0
      %vm352 = vcmp.eq.s32.totalorder %v351, 1
      %vm353 = vmand %vm352, %vm345
      %vm354 = vmand %vm352, %vm346
      %vm355 = vmand %vm352, %vm347
      %vm356 = vmand %vm352, %vm348
      %vm357 = vmand %vm352, %vm349
      %vm358 = vmand %vm352, %vm350
      %v359 = vsel %vm353, 1.0, 0.0
      %v360 = vsel %vm354, 1.0, 0.0
      %v361 = vsel %vm355, 1.0, 0.0
      %v362 = vsel %vm356, 1.0, 0.0
      %v363 = vsel %vm357, 1.0, 0.0
      %v364 = vsel %vm358, 1.0, 0.0
      %vm365 = vcmp.eq.f32.partialorder %v344, %v324
      %vm366 = vcmp.eq.f32.partialorder %v344, %v325
      %vm367 = vcmp.eq.f32.partialorder %v344, %v326
      %vm368 = vcmp.eq.f32.partialorder %v344, %v327
      %vm369 = vcmp.eq.f32.partialorder %v344, %v328
      %vm370 = vcmp.eq.f32.partialorder %v344, %v329
      %vm371 = vcmp.ge.f32.partialorder %v324, 0.0
      %vm372 = vcmp.ge.f32.partialorder %v325, 0.0
      %vm373 = vcmp.ge.f32.partialorder %v326, 0.0
      %vm374 = vcmp.ge.f32.partialorder %v327, 0.0
      %vm375 = vcmp.ge.f32.partialorder %v328, 0.0
      %vm376 = vcmp.ge.f32.partialorder %v329, 0.0
      %vm377 = vmand %vm365, %vm371
      %vm378 = vmand %vm366, %vm372
      %vm379 = vmand %vm367, %vm373
      %vm380 = vmand %vm368, %vm374
      %vm381 = vmand %vm369, %vm375
      %vm382 = vmand %vm370, %vm376
      %v383 = vsel %vm377, 1.0, 0.0
      %v384 = vsel %vm378, 1.0, 0.0
      %v385 = vsel %vm379, 1.0, 0.0
      %v386 = vsel %vm380, 1.0, 0.0
      %v387 = vsel %vm381, 1.0, 0.0
      %v388 = vsel %vm382, 1.0, 0.0
      %v389 = vxor.u32 %v302, 2147483648
      %v390 = vxor.u32 %v305, 2147483648
      %v391 = vxor.u32 %v310, 2147483648
      %v392 = vxor.u32 %v313, 2147483648
      %v393 = vxor.u32 %v318, 2147483648
      %v394 = vxor.u32 %v321, 2147483648
      %v395 = vmul.f32 %v389, 1.442695
      %v396 = vpow.pop %v395
      %v397 = vmul.f32 %v390, 1.442695
      %v398 = vpow.pop %v397
      %v399 = vmul.f32 %v391, 1.442695
      %v400 = vpow.pop %v399
      %v401 = vmul.f32 %v392, 1.442695
      %v402 = vpow.pop %v401
      %v403 = vmul.f32 %v393, 1.442695
      %v404 = vpow.pop %v403
      %v405 = vmul.f32 %v394, 1.442695
      %v406 = vpow.pop %v405
      %v407 = vadd.f32 %v396, 1.0
      %v408 = vadd.f32 %v398, 1.0
      %v409 = vadd.f32 %v400, 1.0
      %v410 = vadd.f32 %v402, 1.0
      %v411 = vadd.f32 %v404, 1.0
      %v412 = vadd.f32 %v406, 1.0
      %v413 = vrcp.pop %v407
      %v414 = vmul.f32 1.0, %v413
      %v415 = vrcp.pop %v408
      %v416 = vmul.f32 1.0, %v415
      %v417 = vrcp.pop %v409
      %v418 = vmul.f32 1.0, %v417
      %v419 = vrcp.pop %v410
      %v420 = vmul.f32 1.0, %v419
      %v421 = vrcp.pop %v411
      %v422 = vmul.f32 1.0, %v421
      %v423 = vrcp.pop %v412
      %v424 = vmul.f32 1.0, %v423
      %v425 = vsub.f32 1.0, %v383
      %v426 = vsub.f32 1.0, %v384
      %v427 = vsub.f32 1.0, %v385
      %v428 = vsub.f32 1.0, %v386
      %v429 = vsub.f32 1.0, %v387
      %v430 = vsub.f32 1.0, %v388
      %v431 = vmul.f32 %v383, %v414
      %v432 = vmul.f32 %v384, %v416
      %v433 = vmul.f32 %v385, %v418
      %v434 = vmul.f32 %v386, %v420
      %v435 = vmul.f32 %v387, %v422
      %v436 = vmul.f32 %v388, %v424
      %v437 = vsub.f32 1.0, %v414
      %v438 = vsub.f32 1.0, %v416
      %v439 = vsub.f32 1.0, %v418
      %v440 = vsub.f32 1.0, %v420
      %v441 = vsub.f32 1.0, %v422
      %v442 = vsub.f32 1.0, %v424
      %v443 = vmul.f32 %v425, %v437
      %v444 = vmul.f32 %v426, %v438
      %v445 = vmul.f32 %v427, %v439
      %v446 = vmul.f32 %v428, %v440
      %v447 = vmul.f32 %v429, %v441
      %v448 = vmul.f32 %v430, %v442
      %v449 = vadd.f32 %v431, %v443
      %v450 = vadd.f32 %v432, %v444
      %v451 = vadd.f32 %v433, %v445
      %v452 = vadd.f32 %v434, %v446
      %v453 = vadd.f32 %v435, %v447
      %v454 = vadd.f32 %v436, %v448
      %v455 = vmul.f32 %v383, 0.25
      %v456 = vmul.f32 %v384, 0.25
      %v457 = vmul.f32 %v385, 0.25
      %v458 = vmul.f32 %v386, 0.25
      %v459 = vmul.f32 %v387, 0.25
      %v460 = vmul.f32 %v388, 0.25
      %v461 = vmul.f32 %v425, 0.75
      %v462 = vmul.f32 %v426, 0.75
      %v463 = vmul.f32 %v427, 0.75
      %v464 = vmul.f32 %v428, 0.75
      %v465 = vmul.f32 %v429, 0.75
      %v466 = vmul.f32 %v430, 0.75
      %v467 = vadd.f32 %v455, %v461
      %v468 = vadd.f32 %v456, %v462
      %v469 = vadd.f32 %v457, %v463
      %v470 = vadd.f32 %v458, %v464
      %v471 = vadd.f32 %v459, %v465
      %v472 = vadd.f32 %v460, %v466
      %v473 = vsub.f32 1.0, %v449
      %v474 = vsub.f32 1.0, %v450
      %v475 = vsub.f32 1.0, %v451
      %v476 = vsub.f32 1.0, %v452
      %v477 = vsub.f32 1.0, %v453
      %v478 = vsub.f32 1.0, %v454
      %v479 = vrsqrt.pop %v473
      %v480 = vmul.f32 %v473, %v479
      %vm481 = vcmp.eq.f32.partialorder %v473, inf
      %v482 = vsel %vm481, %v473, %v480
      %vm483 = vcmp.eq.f32.partialorder %v473, 0.0
      %v484 = vand.u32 %v473, 2147483648
      %v485 = vsel %vm483, %v484, %v482
      %v486 = vrsqrt.pop %v474
      %v487 = vmul.f32 %v474, %v486
      %vm488 = vcmp.eq.f32.partialorder %v474, inf
      %v489 = vsel %vm488, %v474, %v487
      %vm490 = vcmp.eq.f32.partialorder %v474, 0.0
      %v491 = vand.u32 %v474, 2147483648
      %v492 = vsel %vm490, %v491, %v489
      %v493 = vrsqrt.pop %v475
      %v494 = vmul.f32 %v475, %v493
      %vm495 = vcmp.eq.f32.partialorder %v475, inf
      %v496 = vsel %vm495, %v475, %v494
      %vm497 = vcmp.eq.f32.partialorder %v475, 0.0
      %v498 = vand.u32 %v475, 2147483648
      %v499 = vsel %vm497, %v498, %v496
      %v500 = vrsqrt.pop %v476
      %v501 = vmul.f32 %v476, %v500
      %vm502 = vcmp.eq.f32.partialorder %v476, inf
      %v503 = vsel %vm502, %v476, %v501
      %vm504 = vcmp.eq.f32.partialorder %v476, 0.0
      %v505 = vand.u32 %v476, 2147483648
      %v506 = vsel %vm504, %v505, %v503
      %v507 = vrsqrt.pop %v477
      %v508 = vmul.f32 %v477, %v507
      %vm509 = vcmp.eq.f32.partialorder %v477, inf
      %v510 = vsel %vm509, %v477, %v508
      %vm511 = vcmp.eq.f32.partialorder %v477, 0.0
      %v512 = vand.u32 %v477, 2147483648
      %v513 = vsel %vm511, %v512, %v510
      %v514 = vrsqrt.pop %v478
      %v515 = vmul.f32 %v478, %v514
      %vm516 = vcmp.eq.f32.partialorder %v478, inf
      %v517 = vsel %vm516, %v478, %v515
      %vm518 = vcmp.eq.f32.partialorder %v478, 0.0
      %v519 = vand.u32 %v478, 2147483648
      %v520 = vsel %vm518, %v519, %v517
      %v521 = vmul.f32 %v473, %v485
      %v522 = vmul.f32 %v474, %v492
      %v523 = vmul.f32 %v475, %v499
      %v524 = vmul.f32 %v476, %v506
      %v525 = vmul.f32 %v477, %v513
      %v526 = vmul.f32 %v478, %v520
      %v527 = vmax.f32 %v302, 0.0
      %v528 = vmax.f32 %v305, 0.0
      %v529 = vmax.f32 %v310, 0.0
      %v530 = vmax.f32 %v313, 0.0
      %v531 = vmax.f32 %v318, 0.0
      %v532 = vmax.f32 %v321, 0.0
      %v533 = vmul.f32 %v302, %v383
      %v534 = vmul.f32 %v305, %v384
      %v535 = vmul.f32 %v310, %v385
      %v536 = vmul.f32 %v313, %v386
      %v537 = vmul.f32 %v318, %v387
      %v538 = vmul.f32 %v321, %v388
      %v539 = vsub.f32 %v527, %v533
      %v540 = vsub.f32 %v528, %v534
      %v541 = vsub.f32 %v529, %v535
      %v542 = vsub.f32 %v530, %v536
      %v543 = vsub.f32 %v531, %v537
      %v544 = vsub.f32 %v532, %v538
      %vm545 = vcmp.ge.f32.partialorder %v302, 0.0
      %vm546 = vcmp.ge.f32.partialorder %v305, 0.0
      %vm547 = vcmp.ge.f32.partialorder %v310, 0.0
      %vm548 = vcmp.ge.f32.partialorder %v313, 0.0
      %vm549 = vcmp.ge.f32.partialorder %v318, 0.0
      %vm550 = vcmp.ge.f32.partialorder %v321, 0.0
      %v551 = vsel %vm545, %v414, %v437
      %v552 = vsel %vm546, %v416, %v438
      %v553 = vsel %vm547, %v418, %v439
      %v554 = vsel %vm548, %v420, %v440
      %v555 = vsel %vm549, %v422, %v441
      %v556 = vsel %vm550, %v424, %v442
      %v557 = vlog2.pop %v551
      %v558 = vmul.f32 %v557, 0.6931472
      %v559 = vlog2.pop %v552
      %v560 = vmul.f32 %v559, 0.6931472
      %v561 = vlog2.pop %v553
      %v562 = vmul.f32 %v561, 0.6931472
      %v563 = vlog2.pop %v554
      %v564 = vmul.f32 %v563, 0.6931472
      %v565 = vlog2.pop %v555
      %v566 = vmul.f32 %v565, 0.6931472
      %v567 = vlog2.pop %v556
      %v568 = vmul.f32 %v567, 0.6931472
      %v569 = vsub.f32 %v539, %v558
      %v570 = vsub.f32 %v540, %v560
      %v571 = vsub.f32 %v541, %v562
      %v572 = vsub.f32 %v542, %v564
      %v573 = vsub.f32 %v543, %v566
      %v574 = vsub.f32 %v544, %v568
      %v575 = vmul.f32 %v467, %v521
      %v576 = vmul.f32 %v468, %v522
      %v577 = vmul.f32 %v469, %v523
      %v578 = vmul.f32 %v470, %v524
      %v579 = vmul.f32 %v471, %v525
      %v580 = vmul.f32 %v472, %v526
      %v581 = vmul.f32 %v575, %v569
      %v582 = vmul.f32 %v576, %v570
      %v583 = vmul.f32 %v577, %v571
      %v584 = vmul.f32 %v578, %v572
      %v585 = vmul.f32 %v579, %v573
      %v586 = vmul.f32 %v580, %v574
      %v587 = vmul.f32 %v581, %v359
      %v588 = vmul.f32 %v582, %v360
      %v589 = vmul.f32 %v583, %v361
      %v590 = vmul.f32 %v584, %v362
      %v591 = vmul.f32 %v585, %v363
      %v592 = vmul.f32 %v586, %v364
      %vm593 = vcmp.ne.f32.partialorder %v324, 0.0
      %vm594 = vcmp.ne.f32.partialorder %v325, 0.0
      %vm595 = vcmp.ne.f32.partialorder %v326, 0.0
      %vm596 = vcmp.ne.f32.partialorder %v327, 0.0
      %vm597 = vcmp.ne.f32.partialorder %v328, 0.0
      %vm598 = vcmp.ne.f32.partialorder %v329, 0.0
      %v599 = vsel %vm342, 1, 0
      %vm600 = vcmp.eq.s32.totalorder %v599, 1
      %vm601 = vmand %vm600, %vm593
      %vm602 = vmand %vm600, %vm594
      %vm603 = vmand %vm600, %vm595
      %vm604 = vmand %vm600, %vm596
      %vm605 = vmand %vm600, %vm597
      %vm606 = vmand %vm600, %vm598
      %v607 = vsel %vm601, 1.0, 0.0
      %v608 = vsel %vm602, 1.0, 0.0
      %v609 = vsel %vm603, 1.0, 0.0
      %v610 = vsel %vm604, 1.0, 0.0
      %v611 = vsel %vm605, 1.0, 0.0
      %v612 = vsel %vm606, 1.0, 0.0
      %v613 = vsub.f32 %v302, %v324
      %v614 = vsub.f32 %v305, %v325
      %v615 = vsub.f32 %v310, %v326
      %v616 = vsub.f32 %v313, %v327
      %v617 = vsub.f32 %v318, %v328
      %v618 = vsub.f32 %v321, %v329
      %v619 = vand.u32 2147483647, %v613
      %v620 = vand.u32 2147483647, %v614
      %v621 = vand.u32 2147483647, %v615
      %v622 = vand.u32 2147483647, %v616
      %v623 = vand.u32 2147483647, %v617
      %v624 = vand.u32 2147483647, %v618
      %v625 = vmin.f32 %v619, 0.1
      %v626 = vmin.f32 %v620, 0.1
      %v627 = vmin.f32 %v621, 0.1
      %v628 = vmin.f32 %v622, 0.1
      %v629 = vmin.f32 %v623, 0.1
      %v630 = vmin.f32 %v624, 0.1
      %v631 = vsub.f32 %v619, %v625
      %v632 = vsub.f32 %v620, %v626
      %v633 = vsub.f32 %v621, %v627
      %v634 = vsub.f32 %v622, %v628
      %v635 = vsub.f32 %v623, %v629
      %v636 = vsub.f32 %v624, %v630
      %v637 = vmul.f32 %v625, 0.5
      %v638 = vmul.f32 %v626, 0.5
      %v639 = vmul.f32 %v627, 0.5
      %v640 = vmul.f32 %v628, 0.5
      %v641 = vmul.f32 %v629, 0.5
      %v642 = vmul.f32 %v630, 0.5
      %v643 = vmul.f32 %v637, %v625
      %v644 = vmul.f32 %v638, %v626
      %v645 = vmul.f32 %v639, %v627
      %v646 = vmul.f32 %v640, %v628
      %v647 = vmul.f32 %v641, %v629
      %v648 = vmul.f32 %v642, %v630
      %v649 = vmul.f32 %v631, 0.1
      %v650 = vmul.f32 %v632, 0.1
      %v651 = vmul.f32 %v633, 0.1
      %v652 = vmul.f32 %v634, 0.1
      %v653 = vmul.f32 %v635, 0.1
      %v654 = vmul.f32 %v636, 0.1
      %v655 = vadd.f32 %v643, %v649
      %v656 = vadd.f32 %v644, %v650
      %v657 = vadd.f32 %v645, %v651
      %v658 = vadd.f32 %v646, %v652
      %v659 = vadd.f32 %v647, %v653
      %v660 = vadd.f32 %v648, %v654
      %v661 = vmul.f32 %v655, %v607
      %v662 = vmul.f32 %v656, %v608
      %v663 = vmul.f32 %v657, %v609
      %v664 = vmul.f32 %v658, %v610
      %v665 = vmul.f32 %v659, %v611
      %v666 = vmul.f32 %v660, %v612
      %v667 = vadd.f32 %v587, %v661
      %v668 = vadd.f32 %v588, %v662
      %v669 = vadd.f32 %v589, %v663
      %v670 = vadd.f32 %v590, %v664
      %v671 = vadd.f32 %v591, %v665
      %v672 = vadd.f32 %v592, %v666
      %v673 = vadd.f32 %v667, %v668
      %v674 = vadd.f32 %v673, %v669
      %v675 = vadd.f32 %v674, %v670
      %v676 = vadd.f32 %v675, %v671
      %v677 = vadd.f32 %v676, %v672
      %678 = vst [vmem:[%s226] sm:$0xff] %v677
      %p679 = scmp.lt.s32.totalorder %s21, 2
      %s680 = scalar_select %p679, %s21, 2
      %s681 = smul.addr %s680, 8
      %s682 = scalar_lea.vmem %s4, %s681
      // Predicated region
      $region33: #{det_bench_forward.1} parent=31 // pred_check
        %p683 = pneg %p119
      $region34: #{det_bench_forward.1} parent=31 // pred_check_branch
        %685 = sbr.rel (%p683) target = $region36
      $region35: #{det_bench_forward.1} parent=31 // pred_region
        _
      $region36: #{det_bench_forward.1} parent=31 // pred_fallthru
        _
    $region32: #{det_bench_forward.1} parent=5 // pred_fallthru
      _
    %p686 = scmp.le.s32.totalorder 2, %s16
    // Predicated region
    $region37: #{det_bench_forward.1} parent=5 // pred_check
      %p687 = pneg %p686
    $region38: #{det_bench_forward.1} parent=5 // pred_check_branch
      %689 = sbr.rel (%p687) target = $region40
    $region39: #{det_bench_forward.1} parent=5 // pred_region
      %s690 = ssub.s32 %s16, 2
      // Predicated region
      $region41: #{det_bench_forward.1} parent=39 // pred_check
        %p691 = pneg %p125
      $region42: #{det_bench_forward.1} parent=39 // pred_check_branch
        %693 = sbr.rel (%p691) target = $region44
      $region43: #{det_bench_forward.1} parent=39 // pred_region
        %p694 = scmp.lt.s32.totalorder %s22, 2
        %s695 = scalar_select %p694, %s22, 2
        %s696 = smul.addr %s695, 8
        %s697 = scalar_lea.vmem %s4, %s696
      $region44: #{det_bench_forward.1} parent=39 // pred_fallthru
        _
    $region40: #{det_bench_forward.1} parent=5 // pred_fallthru
      _
  $region6: #{det_bench_forward.1} parent=0 // loop_footer
    %s20 = sadd.s32 1, %s16
  $region7: #{det_bench_forward.1} parent=0 // loop_footer_branch
    %15 = sbr.rel target = $region3
  $region8: #{det_bench_forward.1} parent=0 // loop_exit
    _

</llo_original>
